<compile_context>
chip_gen: v6e
topology: v6e:2x2x1
jax: 0.10.0
libtpu: 0.0.40
codegen_flags: <defaults>
</compile_context>

<pallas_src>
import math
import functools

import jax
import jax.numpy as jnp
from jax.experimental import pallas as pl
from jax.experimental.pallas import tpu as pltpu

C_LIGHT = 3.0e8  # speed of light [m/s]; depth is in meters.


def _masktof_iq_kernel(depth_ref, lf_ref, mval_ref, dn_ref, out_ref, *, f, T, g):
    """One (batch, spatial-tile): masked view-mean + collapsed quad decode."""
    depth = depth_ref[0]                         # (1, THW)
    lf = lf_ref[0].astype(jnp.float32)           # (C, THW)  (bf16 input supported)
    mval = mval_ref[...]                         # (C, THW)  precomputed mask weight
    dn = dn_ref[0]                               # (2, THW)  (n1-n3, n4-n2)

    # view-mean of masked amplitude: single multiply + reduce (instead of 4)
    amp = (g * T) * jnp.mean(lf * mval, axis=0, keepdims=True)   # (1, THW)

    # phase = 4*pi*f*depth / c
    phase = (4.0 * math.pi * f / C_LIGHT) * depth                # (1, THW)

    i_val = amp * jnp.cos(phase) + dn[0:1]       # I = Q1 - Q3
    q_val = amp * jnp.sin(phase) + dn[1:2]       # Q = Q4 - Q2
    out_ref[0] = jnp.concatenate([i_val, q_val], axis=0)         # (2, THW)


def _pick_hw_tile(hw, target=1 << 16):
    """Largest multiple-of-128 divisor of hw that is <= target (else whole hw)."""
    if hw <= target:
        return hw
    t = (target // 128) * 128
    while t >= 128:
        if hw % t == 0:
            return t
        t -= 128
    return hw


def mask_tof_forward(lightfield, depth, mask_param, noise, *,
                     f, T, g, pad_x=0, pad_y=0,
                     y_repeat=1, x_repeat=1, softmax_weight=1.0):
    """MaskToFNet.forward: single-frequency, patch=False, use_net=False."""
    B, C, H, W = lightfield.shape
    HW = H * W

    # --- mask crop / tile (patch=False path of AmplitudeMask.forward) ----
    # Guard each pad axis independently (slice 0:-0 would wipe the mask).
    m = mask_param
    if pad_y > 0:
        m = m[:, :, pad_y:-pad_y, :]
    if pad_x > 0:
        m = m[:, :, :, pad_x:-pad_x]
    m = jnp.tile(m, (1, 1, y_repeat, x_repeat))                   # (C, 2, H, W)

    # 2-channel softmax (keep channel 1) == sigmoid(w*(m1 - m0)); the mask is
    # batch-invariant, so compute it once here instead of per grid step.
    mval = jax.nn.sigmoid(
        softmax_weight * (m[:, 1] - m[:, 0]).astype(jnp.float32)
    ).reshape(C, HW)                                              # (C, HW)

    # Only the two noise differentials are ever needed by decode_quad.
    dnoise = jnp.stack([noise[:, 0] - noise[:, 2],
                        noise[:, 3] - noise[:, 1]],
                       axis=1).astype(jnp.float32).reshape(B, 2, HW)

    lf = lightfield.reshape(B, C, HW)
    d = depth.astype(jnp.float32).reshape(B, 1, HW)

    thw = _pick_hw_tile(HW)
    n_t = HW // thw

    kernel = functools.partial(_masktof_iq_kernel, f=f, T=T, g=g)

    iq = pl.pallas_call(
        kernel,
        grid=(B, n_t),
        in_specs=[
            pl.BlockSpec((1, 1, thw), lambda b, t: (b, 0, t)),    # depth
            pl.BlockSpec((1, C, thw), lambda b, t: (b, 0, t)),    # lightfield
            pl.BlockSpec((C, thw), lambda b, t: (0, t)),          # mask weight
            pl.BlockSpec((1, 2, thw), lambda b, t: (b, 0, t)),    # noise diffs
        ],
        out_specs=pl.BlockSpec((1, 2, thw), lambda b, t: (b, 0, t)),
        out_shape=jax.ShapeDtypeStruct((B, 2, HW), jnp.float32),  # [I; Q]
        compiler_params=pltpu.CompilerParams(
            dimension_semantics=("parallel", "parallel"),
            vmem_limit_bytes=48 * 1024 * 1024),
    )(d, lf, mval, dnoise)

    i_diff = iq[:, 0].reshape(B, H, W)
    q_diff = iq[:, 1].reshape(B, H, W)

    # --- decode_quad phase estimate + phase2depth (per-pixel glue) -------
    # TODO(synk): arctan2 kept in plain JAX; decode_quad's (T, mT) amplitude/
    #             offset outputs and the multi-frequency unwrap_ranking path
    #             are not reproduced (depth only needs phi for 1 frequency).
    phi = jnp.mod(jnp.arctan2(q_diff, i_diff), 2.0 * math.pi)     # (B, H, W)
    depth_recon = phi * C_LIGHT / (4.0 * math.pi * f)             # phase2depth
    return depth_recon[:, None, :, :]                             # (B, 1, H, W)


def _reference_forward(lightfield, depth, mask_param, noise, *,
                       f, T, g, pad_x=0, pad_y=0,
                       y_repeat=1, x_repeat=1, softmax_weight=1.0):
    """Pure-JAX mirror of the original 4-bucket PyTorch path (for checking)."""
    m = mask_param
    if pad_y > 0:
        m = m[:, :, pad_y:-pad_y, :]
    if pad_x > 0:
        m = m[:, :, :, pad_x:-pad_x]
    m = jnp.tile(m, (1, 1, y_repeat, x_repeat))                   # (C, 2, H, W)
    mval = jax.nn.softmax(softmax_weight * m, axis=1)[:, 1]       # (C, H, W)

    phase = (4.0 * math.pi * f / C_LIGHT) * depth                 # (B, H, W)
    quads = []
    for k, psi in enumerate((0.0, 0.5 * math.pi, math.pi, 1.5 * math.pi)):
        amp = (0.5 * g * T) * lightfield * (1.0 + jnp.cos(phase + psi))[:, None]
        amp = amp * mval[None]                                    # (B, C, H, W)
        quads.append(jnp.mean(amp, axis=1) + noise[:, k])         # (B, H, W)
    q1, q2, q3, q4 = quads
    phi = jnp.mod(jnp.arctan2(q4 - q2, q1 - q3), 2.0 * math.pi)
    return (phi * C_LIGHT / (4.0 * math.pi * f))[:, None]


if __name__ == "__main__":
    # Small shapes consistent with the module:
    #   views_x = views_y = 3  -> C = 9 lightfield views
    #   patch_height = patch_width = img_height = img_width = 16, pad = 0
    B, C, H, W = 2, 9, 16, 16
    f = 20.0e6        # args.f_list = [20 MHz]
    T = 1.0           # integration time
    g = 1.0           # gain
    AWGN_sigma = 0.01

    key = jax.random.PRNGKey(0)
    k_lf, k_d, k_mask, k_noise = jax.random.split(key, 4)

    lightfield = jax.random.uniform(k_lf, (B, C, H, W), jnp.float32)
    depth = jax.random.uniform(k_d, (B, H, W), jnp.float32,
                               minval=0.5, maxval=4.0)            # meters
    # args.init == 'uniform': mask ~ U(0, 1), shape (views, 2, ph, pw)
    mask_param = jax.random.uniform(k_mask, (C, 2, H, W), jnp.float32)
    # torch.normal(mean=0, std=AWGN_sigma, size=(B, 4, H, W)); patch=False path
    # does not apply the uniform noise_scale sqrt factor.
    noise = AWGN_sigma * jax.random.normal(k_noise, (B, 4, H, W), jnp.float32)

    kwargs = dict(f=f, T=T, g=g, pad_x=0, pad_y=0,
                  y_repeat=1, x_repeat=1, softmax_weight=1.0)

    # TODO(synk): args.use_net / HourglassRefinement path not implemented
    #             (external module); use_net=False here.
    out = mask_tof_forward(lightfield, depth, mask_param, noise, **kwargs)
    out = jax.block_until_ready(out)
    assert out.shape == (B, 1, H, W), out.shape

    ref = _reference_forward(lightfield, depth, mask_param, noise, **kwargs)
    assert jnp.allclose(out, ref, rtol=1e-4, atol=1e-4), \
        float(jnp.max(jnp.abs(out - ref)))

    print("KERNEL_OK")
</pallas_src>

<mosaic_0001>
module attributes {stable_mosaic.version = 11 : i64} {
  func.func @_masktof_iq_kernel(%arg0: i32, %arg1: i32, %arg2: memref<1x1x256xf32, #tpu.memory_space<vmem>>, %arg3: memref<1x9x256xf32, #tpu.memory_space<vmem>>, %arg4: memref<9x256xf32, #tpu.memory_space<vmem>>, %arg5: memref<1x2x256xf32, #tpu.memory_space<vmem>>, %arg6: memref<1x2x256xf32, #tpu.memory_space<vmem>>) attributes {dimension_semantics = [#tpu.dimension_semantics<parallel>, #tpu.dimension_semantics<parallel>], iteration_bounds = array<i64: 2, 1>, scalar_prefetch = 0 : i64, scratch_operands = 0 : i64, tpu.core_type = #tpu.core_type<tc>, window_params = [{transform_indices = @transform_0, window_bounds = array<i64: 1, 1, 256>}, {transform_indices = @transform_1, window_bounds = array<i64: 1, 9, 256>}, {transform_indices = @transform_2, window_bounds = array<i64: 9, 256>}, {transform_indices = @transform_3, window_bounds = array<i64: 1, 2, 256>}, {transform_indices = @transform_4, window_bounds = array<i64: 1, 2, 256>}]} {
    %c0 = arith.constant 0 : index
    %c0_0 = arith.constant 0 : index
    %c0_1 = arith.constant 0 : index
    %0 = vector.load %arg2[%c0, %c0_0, %c0_1] : memref<1x1x256xf32, #tpu.memory_space<vmem>>, vector<1x1x256xf32>
    %1 = vector.shape_cast %0 : vector<1x1x256xf32> to vector<1x256xf32>
    %c0_2 = arith.constant 0 : index
    %c0_3 = arith.constant 0 : index
    %c0_4 = arith.constant 0 : index
    %2 = vector.load %arg3[%c0_2, %c0_3, %c0_4] : memref<1x9x256xf32, #tpu.memory_space<vmem>>, vector<1x9x256xf32>
    %3 = vector.shape_cast %2 : vector<1x9x256xf32> to vector<9x256xf32>
    %c0_5 = arith.constant 0 : index
    %c0_6 = arith.constant 0 : index
    %4 = vector.load %arg4[%c0_5, %c0_6] : memref<9x256xf32, #tpu.memory_space<vmem>>, vector<9x256xf32>
    %c0_7 = arith.constant 0 : index
    %c0_8 = arith.constant 0 : index
    %c0_9 = arith.constant 0 : index
    %5 = vector.load %arg5[%c0_7, %c0_8, %c0_9] : memref<1x2x256xf32, #tpu.memory_space<vmem>>, vector<1x2x256xf32>
    %6 = vector.shape_cast %5 : vector<1x2x256xf32> to vector<2x256xf32>
    %7 = arith.mulf %3, %4 : vector<9x256xf32>
    %cst = arith.constant dense<0.000000e+00> : vector<256xf32>
    %8 = vector.multi_reduction <add>, %7, %cst [0] : vector<9x256xf32> to vector<256xf32>
    %9 = vector.shape_cast %8 : vector<256xf32> to vector<1x256xf32>
    %cst_10 = arith.constant 9.000000e+00 : f32
    %10 = vector.broadcast %cst_10 : f32 to vector<1x256xf32>
    %11 = arith.divf %9, %10 : vector<1x256xf32>
    %cst_11 = arith.constant 1.000000e+00 : f32
    %12 = vector.broadcast %cst_11 : f32 to vector<1x256xf32>
    %13 = arith.mulf %12, %11 : vector<1x256xf32>
    %cst_12 = arith.constant 0.837758064 : f32
    %14 = vector.broadcast %cst_12 : f32 to vector<1x256xf32>
    %15 = arith.mulf %14, %1 : vector<1x256xf32>
    %16 = math.cos %15 : vector<1x256xf32>
    %17 = arith.mulf %13, %16 : vector<1x256xf32>
    %18 = vector.extract_strided_slice %6 {offsets = [0, 0], sizes = [1, 256], strides = [1, 1]} : vector<2x256xf32> to vector<1x256xf32>
    %19 = arith.addf %17, %18 : vector<1x256xf32>
    %20 = math.sin %15 : vector<1x256xf32>
    %21 = arith.mulf %13, %20 : vector<1x256xf32>
    %22 = vector.extract_strided_slice %6 {offsets = [1, 0], sizes = [1, 256], strides = [1, 1]} : vector<2x256xf32> to vector<1x256xf32>
    %23 = arith.addf %21, %22 : vector<1x256xf32>
    %24 = tpu.concatenate %19, %23 in 0 : vector<1x256xf32>, vector<1x256xf32> -> vector<2x256xf32>
    %c0_13 = arith.constant 0 : index
    %c0_14 = arith.constant 0 : index
    %c0_15 = arith.constant 0 : index
    %25 = vector.load %arg6[%c0_13, %c0_14, %c0_15] : memref<1x2x256xf32, #tpu.memory_space<vmem>>, vector<1x2x256xf32>
    %26 = vector.shape_cast %25 : vector<1x2x256xf32> to vector<2x256xf32>
    %27 = vector.shape_cast %24 : vector<2x256xf32> to vector<1x2x256xf32>
    tpu.vector_store %arg6[%c0_13, %c0_14, %c0_15], %27 {strides = array<i32>} : memref<1x2x256xf32, #tpu.memory_space<vmem>>, vector<1x2x256xf32>,
    return
  }
  func.func @transform_0(%arg0: i32, %arg1: i32) -> (i32, i32, i32) {
    %c0_i32 = arith.constant 0 : i32
    %c0_i32_0 = arith.constant 0 : i32
    return %arg0, %c0_i32, %arg1 : i32, i32, i32
  }
  func.func @transform_1(%arg0: i32, %arg1: i32) -> (i32, i32, i32) {
    %c0_i32 = arith.constant 0 : i32
    %c0_i32_0 = arith.constant 0 : i32
    return %arg0, %c0_i32, %arg1 : i32, i32, i32
  }
  func.func @transform_2(%arg0: i32, %arg1: i32) -> (i32, i32) {
    %c0_i32 = arith.constant 0 : i32
    %c0_i32_0 = arith.constant 0 : i32
    return %c0_i32, %arg1 : i32, i32
  }
  func.func @transform_3(%arg0: i32, %arg1: i32) -> (i32, i32, i32) {
    %c0_i32 = arith.constant 0 : i32
    %c0_i32_0 = arith.constant 0 : i32
    return %arg0, %c0_i32, %arg1 : i32, i32, i32
  }
  func.func @transform_4(%arg0: i32, %arg1: i32) -> (i32, i32, i32) {
    %c0_i32 = arith.constant 0 : i32
    %c0_i32_0 = arith.constant 0 : i32
    return %arg0, %c0_i32, %arg1 : i32, i32, i32
  }
}

</mosaic_0001>

<llo_original>
// kernel: tpu_custom_call.1
$region0: #{tpu_custom_call.1}
  #allocation0 [shape = 'u32[]', space=smem, size = 0x4, offset = 0x4, fixed_abs, tag = 'smem constant byte address 0x4 - core index']
  #allocation1 [shape = 'u32[144,128]{1,0:T(1,128)}', space=vmem, size = 0x12000, scoped, tag = 'internal scratch']
  %s0 = inlined_call_operand.vmem [shape: f32[2,1,256], index: 0, kind: input, shape index: {}]
  %s1 = inlined_call_operand.vmem [shape: f32[2,9,256], index: 1, kind: input, shape index: {}]
  %s2 = inlined_call_operand.vmem [shape: f32[9,256], index: 2, kind: input, shape index: {}]
  %s3 = inlined_call_operand.vmem [shape: f32[2,2,256], index: 3, kind: input, shape index: {}]
  %s4 = inlined_call_operand.hbm [shape: f32[2,2,256], index: 4, kind: output, shape index: {}]
  %s5 = sld [smem:[#allocation0]]
  $region49: #{tpu_custom_call.1} parent=0
    _
  %s7 = ssub.s32 1, %s5
  %s8 = scalar_select 0, %s7, %s5
  $region1: #{tpu_custom_call.1} parent=0
    #allocation2 [shape = 'u8[4096]{0}', space=vmem, size = 0x1000, scoped, tag = 'output window, operand 0']
    #allocation3 [shape = 's32[2]{0}', space=sflag, size = 0x8, scoped, tag = 'scoped memory for tpu_custom_call.1']
    %9 = vsyncpa [#allocation3], 0
    %s10 = scalar_lea.sflag [#allocation3], 1
    %11 = vsyncpa %s10, 0
    loop: start=0, step=1, limit=4
    $region2: #{tpu_custom_call.1} parent=1 // loop_pre_header
      _
    $region3: #{tpu_custom_call.1} parent=1 // loop_header
      %s13 = sphi 0, %s17
      %p14 = scmp.ge.s32.totalorder %s13, 4
      %s20 = sphi 0, %s32
      %s21 = sphi 0, %s28
      %s22 = sphi 0, %s20
      %s23 = sphi 0, %s21
      %s24 = sphi 0, %s22
      %s25 = sphi 0, %s23
      %s37 = sphi 0, %s39
      %s40 = sphi 0, %s37
      %s41 = sphi 0, %s40
      %s57 = sphi 0, %s41
      %s65 = sphi 0, %s67
      %s68 = sphi 0, %s65
      %s69 = sphi 0, %s68
      %s85 = sphi 0, %s69
      %s91 = sphi 0, %s93
      %s94 = sphi 0, %s91
      %s95 = sphi 0, %s94
      %s111 = sphi 0, %s95
      %s119 = sphi 0, %s121
      %s122 = sphi 0, %s119
      %s123 = sphi 0, %s122
      %s139 = sphi 0, %s123
      %s147 = sphi 0, %s149
      %s150 = sphi 0, %s147
      %s151 = sphi 0, %s150
      %s167 = sphi 0, %s151
    $region4: #{tpu_custom_call.1} parent=1 // loop_header_branch
      %16 = sbr.rel (%p14) target = $region8
    $region5: #{tpu_custom_call.1} parent=1 // loop_body
      %s18 = ssub.s32 %s13, 1
      %s19 = ssub.s32 %s13, 2
      %s26 = sadd.s32 1, %s21
      %p27 = scmp.ge.s32.totalorder %s26, 1
      %s28 = scalar_select %p27, 0, %s26
      %s29 = sadd.s32 1, %s20
      %s30 = scalar_select %p27, %s29, %s20
      %p31 = scmp.ge.s32.totalorder %s30, 2
      %s32 = scalar_select %p31, 0, %s30
      %s33 = ssub.s32 %s20, %s32
      %s34 = ssub.s32 %s21, %s28
      %s35 = sor.u32 %s33, %s34
      %p36 = scmp.eq.s32.totalorder %s35, 0
      %s38 = sadd.s32 %s37, 1
      %s39 = scalar_select %p36, %s37, %s38
      %p42 = pneg %p36
      %p43 = scmp.eq.s32.totalorder %s13, 1
      %p44 = por %p42, %p43
      %p45 = scmp.ne.s32.totalorder %s37, %s40
      %p46 = scmp.eq.s32.totalorder %s13, 0
      %p47 = por %p45, %p46
      %p48 = scmp.ne.s32.totalorder %s37, %s40
      %p49 = scmp.eq.s32.totalorder %s18, 1
      %p50 = por %p48, %p49
      %p51 = scmp.ne.s32.totalorder %s40, %s41
      %p52 = scmp.eq.s32.totalorder %s18, 0
      %p53 = por %p51, %p52
      %p54 = scmp.ne.s32.totalorder %s40, %s41
      %p55 = scmp.eq.s32.totalorder %s19, 1
      %p56 = por %p54, %p55
      %p58 = scmp.ne.s32.totalorder %s41, %s57
      %p59 = scmp.eq.s32.totalorder %s19, 0
      %p60 = por %p58, %p59
      %s61 = ssub.s32 %s20, %s32
      %s62 = ssub.s32 %s21, %s28
      %s63 = sor.u32 %s61, %s62
      %p64 = scmp.eq.s32.totalorder %s63, 0
      %s66 = sadd.s32 %s65, 1
      %s67 = scalar_select %p64, %s65, %s66
      %p70 = pneg %p64
      %p71 = scmp.eq.s32.totalorder %s13, 1
      %p72 = por %p70, %p71
      %p73 = scmp.ne.s32.totalorder %s65, %s68
      %p74 = scmp.eq.s32.totalorder %s13, 0
      %p75 = por %p73, %p74
      %p76 = scmp.ne.s32.totalorder %s65, %s68
      %p77 = scmp.eq.s32.totalorder %s18, 1
      %p78 = por %p76, %p77
      %p79 = scmp.ne.s32.totalorder %s68, %s69
      %p80 = scmp.eq.s32.totalorder %s18, 0
      %p81 = por %p79, %p80
      %p82 = scmp.ne.s32.totalorder %s68, %s69
      %p83 = scmp.eq.s32.totalorder %s19, 1
      %p84 = por %p82, %p83
      %p86 = scmp.ne.s32.totalorder %s69, %s85
      %p87 = scmp.eq.s32.totalorder %s19, 0
      %p88 = por %p86, %p87
      %s89 = ssub.s32 %s21, %s28
      %p90 = scmp.eq.s32.totalorder %s89, 0
      %s92 = sadd.s32 %s91, 1
      %s93 = scalar_select %p90, %s91, %s92
      %p96 = pneg %p90
      %p97 = scmp.eq.s32.totalorder %s13, 1
      %p98 = por %p96, %p97
      %p99 = scmp.ne.s32.totalorder %s91, %s94
      %p100 = scmp.eq.s32.totalorder %s13, 0
      %p101 = por %p99, %p100
      %p102 = scmp.ne.s32.totalorder %s91, %s94
      %p103 = scmp.eq.s32.totalorder %s18, 1
      %p104 = por %p102, %p103
      %p105 = scmp.ne.s32.totalorder %s94, %s95
      %p106 = scmp.eq.s32.totalorder %s18, 0
      %p107 = por %p105, %p106
      %p108 = scmp.ne.s32.totalorder %s94, %s95
      %p109 = scmp.eq.s32.totalorder %s19, 1
      %p110 = por %p108, %p109
      %p112 = scmp.ne.s32.totalorder %s95, %s111
      %p113 = scmp.eq.s32.totalorder %s19, 0
      %p114 = por %p112, %p113
      %s115 = ssub.s32 %s20, %s32
      %s116 = ssub.s32 %s21, %s28
      %s117 = sor.u32 %s115, %s116
      %p118 = scmp.eq.s32.totalorder %s117, 0
      %s120 = sadd.s32 %s119, 1
      %s121 = scalar_select %p118, %s119, %s120
      %p124 = pneg %p118
      %p125 = scmp.eq.s32.totalorder %s13, 1
      %p126 = por %p124, %p125
      %p127 = scmp.ne.s32.totalorder %s119, %s122
      %p128 = scmp.eq.s32.totalorder %s13, 0
      %p129 = por %p127, %p128
      %p130 = scmp.ne.s32.totalorder %s119, %s122
      %p131 = scmp.eq.s32.totalorder %s18, 1
      %p132 = por %p130, %p131
      %p133 = scmp.ne.s32.totalorder %s122, %s123
      %p134 = scmp.eq.s32.totalorder %s18, 0
      %p135 = por %p133, %p134
      %p136 = scmp.ne.s32.totalorder %s122, %s123
      %p137 = scmp.eq.s32.totalorder %s19, 1
      %p138 = por %p136, %p137
      %p140 = scmp.ne.s32.totalorder %s123, %s139
      %p141 = scmp.eq.s32.totalorder %s19, 0
      %p142 = por %p140, %p141
      %s143 = ssub.s32 %s20, %s32
      %s144 = ssub.s32 %s21, %s28
      %s145 = sor.u32 %s143, %s144
      %p146 = scmp.eq.s32.totalorder %s145, 0
      %s148 = sadd.s32 %s147, 1
      %s149 = scalar_select %p146, %s147, %s148
      %p152 = pneg %p146
      %p153 = scmp.eq.s32.totalorder %s13, 1
      %p154 = por %p152, %p153
      %p155 = scmp.ne.s32.totalorder %s147, %s150
      %p156 = scmp.eq.s32.totalorder %s13, 0
      %p157 = por %p155, %p156
      %p158 = scmp.ne.s32.totalorder %s147, %s150
      %p159 = scmp.eq.s32.totalorder %s18, 1
      %p160 = por %p158, %p159
      %p161 = scmp.ne.s32.totalorder %s150, %s151
      %p162 = scmp.eq.s32.totalorder %s18, 0
      %p163 = por %p161, %p162
      %p164 = scmp.ne.s32.totalorder %s150, %s151
      %p165 = scmp.eq.s32.totalorder %s19, 1
      %p166 = por %p164, %p165
      %p168 = scmp.ne.s32.totalorder %s151, %s167
      %p169 = scmp.eq.s32.totalorder %s19, 0
      %p170 = por %p168, %p169
      %p171 = scmp.le.s32.totalorder 1, %s13
      %p172 = scmp.lt.s32.totalorder %s13, 3
      %p173 = pnand %p171, %p172
      %p174 = pneg %p173
      // Predicated region
      $region9: #{tpu_custom_call.1} parent=5 // pred_check
        _
      $region10: #{tpu_custom_call.1} parent=5 // pred_check_branch
        %176 = sbr.rel (%p173) target = $region12
      $region11: #{tpu_custom_call.1} parent=5 // pred_region
        %s177 = ssub.s32 %s13, 1
        // Predicated region
        $region13: #{tpu_custom_call.1} parent=11 // pred_check
          %p178 = pneg %p107
        $region14: #{tpu_custom_call.1} parent=11 // pred_check_branch
          %180 = sbr.rel (%p178) target = $region16
        $region15: #{tpu_custom_call.1} parent=11 // pred_region
          %s181 = smul.u32 2, %s23
          %p182 = scmp.lt.s32.totalorder %s181, 1
          %s183 = scalar_select %p182, %s181, 1
          %s184 = smul.addr %s183, 8
          %s185 = scalar_lea.vmem %s2, %s184
          %s186 = smul.u32 2, %s23
        $region16: #{tpu_custom_call.1} parent=11 // pred_fallthru
          _
      $region12: #{tpu_custom_call.1} parent=5 // pred_fallthru
        _
      %p187 = scmp.lt.s32.totalorder %s13, 2
      // Predicated region
      $region17: #{tpu_custom_call.1} parent=5 // pred_check
        %p188 = pneg %p187
      $region18: #{tpu_custom_call.1} parent=5 // pred_check_branch
        %190 = sbr.rel (%p188) target = $region20
      $region19: #{tpu_custom_call.1} parent=5 // pred_region
        // Predicated region
        $region21: #{tpu_custom_call.1} parent=19 // pred_check
          %p191 = pneg %p47
        $region22: #{tpu_custom_call.1} parent=19 // pred_check_branch
          %193 = sbr.rel (%p191) target = $region24
        $region23: #{tpu_custom_call.1} parent=19 // pred_region
          %s194 = smul.u32 2, %s21
          %p195 = scmp.lt.s32.totalorder %s20, 1
          %s196 = scalar_select %p195, %s20, 1
          %p197 = scmp.lt.s32.totalorder %s194, 1
          %s198 = scalar_select %p197, %s194, 1
          %s199 = smul.addr %s196, 2
          %s200 = sadd.s32 %s198, %s199
          %s201 = scalar_lea.vmem %s0, %s200
          %s202 = smul.u32 2, %s21
        $region24: #{tpu_custom_call.1} parent=19 // pred_fallthru
          _
        // Predicated region
        $region25: #{tpu_custom_call.1} parent=19 // pred_check
          %p203 = pneg %p75
        $region26: #{tpu_custom_call.1} parent=19 // pred_check_branch
          %205 = sbr.rel (%p203) target = $region28
        $region27: #{tpu_custom_call.1} parent=19 // pred_region
          %s206 = smul.u32 2, %s21
          %p207 = scmp.lt.s32.totalorder %s20, 1
          %s208 = scalar_select %p207, %s20, 1
          %p209 = scmp.lt.s32.totalorder %s206, 1
          %s210 = scalar_select %p209, %s206, 1
          %s211 = smul.addr %s208, 4
          %s212 = sadd.s32 %s210, %s211
          %s213 = smul.addr %s212, 8
          %s214 = scalar_lea.vmem %s1, %s213
          %s215 = smul.u32 2, %s21
        $region28: #{tpu_custom_call.1} parent=19 // pred_fallthru
          _
        // Predicated region
        $region29: #{tpu_custom_call.1} parent=19 // pred_check
          %p216 = pneg %p129
        $region30: #{tpu_custom_call.1} parent=19 // pred_check_branch
          %218 = sbr.rel (%p216) target = $region32
        $region31: #{tpu_custom_call.1} parent=19 // pred_region
          %s219 = smul.u32 2, %s21
          %p220 = scmp.lt.s32.totalorder %s20, 1
          %s221 = scalar_select %p220, %s20, 1
          %p222 = scmp.lt.s32.totalorder %s219, 1
          %s223 = scalar_select %p222, %s219, 1
          %s224 = smul.addr %s221, 2
          %s225 = sadd.s32 %s223, %s224
          %s226 = smul.addr %s225, 2
          %s227 = scalar_lea.vmem %s3, %s226
          %s228 = smul.u32 2, %s21
        $region32: #{tpu_custom_call.1} parent=19 // pred_fallthru
          _
      $region20: #{tpu_custom_call.1} parent=5 // pred_fallthru
        _
      %p229 = scmp.le.s32.totalorder 1, %s13
      %p230 = scmp.lt.s32.totalorder %s13, 3
      %p231 = pnand %p229, %p230
      %p232 = pneg %p231
      // Predicated region
      $region33: #{tpu_custom_call.1} parent=5 // pred_check
        _
      $region34: #{tpu_custom_call.1} parent=5 // pred_check_branch
        %234 = sbr.rel (%p231) target = $region36
      $region35: #{tpu_custom_call.1} parent=5 // pred_region
        %s235 = ssub.s32 %s13, 1
        %s236 = smul.u32 2, %s23
        %p237 = scmp.lt.s32.totalorder %s22, 1
        %s238 = scalar_select %p237, %s22, 1
        %p239 = scmp.lt.s32.totalorder %s236, 1
        %s240 = scalar_select %p239, %s236, 1
        %s241 = smul.addr %s238, 2
        %s242 = sadd.s32 %s240, %s241
        %s243 = scalar_lea.vmem %s0, %s242
        %p244 = pneg %p53
        %p245 = pneg %p50
        %s246 = smul.u32 2, %s23
        %p247 = scmp.lt.s32.totalorder %s22, 1
        %s248 = scalar_select %p247, %s22, 1
        %p249 = scmp.lt.s32.totalorder %s246, 1
        %s250 = scalar_select %p249, %s246, 1
        %s251 = smul.addr %s248, 4
        %s252 = sadd.s32 %s250, %s251
        %s253 = smul.addr %s252, 8
        %s254 = scalar_lea.vmem %s1, %s253
        %p255 = pneg %p81
        %p256 = pneg %p78
        %s257 = smul.u32 2, %s23
        %p258 = scmp.lt.s32.totalorder %s257, 1
        %s259 = scalar_select %p258, %s257, 1
        %s260 = smul.addr %s259, 8
        %s261 = scalar_lea.vmem %s2, %s260
        %p262 = pneg %p107
        %p263 = pneg %p104
        %s264 = smul.u32 2, %s23
        %p265 = scmp.lt.s32.totalorder %s22, 1
        %s266 = scalar_select %p265, %s22, 1
        %p267 = scmp.lt.s32.totalorder %s264, 1
        %s268 = scalar_select %p267, %s264, 1
        %s269 = smul.addr %s266, 2
        %s270 = sadd.s32 %s268, %s269
        %s271 = smul.addr %s270, 2
        %s272 = scalar_lea.vmem %s3, %s271
        %p273 = pneg %p135
        %p274 = pneg %p132
        %p275 = pneg %p163
        %p276 = pneg %p160
        %s277 = sand.u32 %s150, 1
        %s278 = scalar_lea.sflag [#allocation3], %s277
        %s279 = sand.u32 %s150, 1
        %s280 = smul.addr %s279, 4
        %s281 = scalar_lea.vmem [#allocation2], %s280
        %s282 = smul.u32 2, %s23
        %p283 = scmp.lt.s32.totalorder %s22, 1
        %s284 = scalar_select %p283, %s22, 1
        %p285 = scmp.lt.s32.totalorder %s282, 1
        %s286 = scalar_select %p285, %s282, 1
        %s287 = smul.addr %s284, 2
        %s288 = sadd.s32 %s286, %s287
        %s289 = scalar_lea.vmem %s0, %s288
        %s290 = smul.u32 2, %s23
        %s291 = smul.u32 2, %s23
        %p292 = scmp.lt.s32.totalorder %s22, 1
        %s293 = scalar_select %p292, %s22, 1
        %p294 = scmp.lt.s32.totalorder %s291, 1
        %s295 = scalar_select %p294, %s291, 1
        %s296 = smul.addr %s293, 4
        %s297 = sadd.s32 %s295, %s296
        %s298 = smul.addr %s297, 8
        %s299 = scalar_lea.vmem %s1, %s298
        %s300 = smul.u32 2, %s23
        %s301 = smul.u32 2, %s23
        %p302 = scmp.lt.s32.totalorder %s301, 1
        %s303 = scalar_select %p302, %s301, 1
        %s304 = smul.addr %s303, 8
        %s305 = scalar_lea.vmem %s2, %s304
        %s306 = smul.u32 2, %s23
        %s307 = smul.u32 2, %s23
        %p308 = scmp.lt.s32.totalorder %s22, 1
        %s309 = scalar_select %p308, %s22, 1
        %p310 = scmp.lt.s32.totalorder %s307, 1
        %s311 = scalar_select %p310, %s307, 1
        %s312 = smul.addr %s309, 2
        %s313 = sadd.s32 %s311, %s312
        %s314 = smul.addr %s313, 2
        %s315 = scalar_lea.vmem %s3, %s314
        %s316 = smul.u32 2, %s23
        %s317 = smul.u32 2, %s23
        %v318 = vld [vmem:[%s289] sm:$0x3]
        %v319 = vld [vmem:[%s299] sm:$0xff]
        %v320 = vld [vmem:[%s299 + $0x8] sm:$0xff]
        %v321 = vld [vmem:[%s299 + $0x10] sm:$0x1]
        %v322 = vld [vmem:[%s299 + $0x18] sm:$0x1]
        %v323 = vld [vmem:[%s305] sm:$0xff]
        %v324 = vld [vmem:[%s305 + $0x8] sm:$0xff]
        %v325 = vld [vmem:[%s305 + $0x10] sm:$0x1]
        %v326 = vld [vmem:[%s305 + $0x18] sm:$0x1]
        %v327 = vld [vmem:[%s315] sm:$0xf]
        %v328 = vmul.f32 %v319, %v323
        %v329 = vmul.f32 %v320, %v324
        %v330 = vmul.f32 %v321, %v325
        %v331 = vmul.f32 %v322, %v326
        %vm332 = vcmask 1040384
        %v333 = vsel %vm332, %v330, 0.0
        %v334 = vadd.f32 %v328, %v333
        %v335 = vrot.slane %v334, 4
        %v336 = vadd.f32 %v334, %v335
        %v337 = vrot.slane %v336, 2
        %v338 = vadd.f32 %v336, %v337
        %v339 = vrot.slane %v338, 1
        %v340 = vadd.f32 %v338, %v339
        %v341 = vsel %vm332, %v331, 0.0
        %v342 = vadd.f32 %v329, %v341
        %v343 = vrot.slane %v342, 4
        %v344 = vadd.f32 %v342, %v343
        %v345 = vrot.slane %v344, 2
        %v346 = vadd.f32 %v344, %v345
        %v347 = vrot.slane %v346, 1
        %v348 = vadd.f32 %v346, %v347
        %v349 = vrcp.pop 9.0
        %v350 = vmul.f32 %v340, %v349
        %v351 = vmul.f32 %v348, %v349
        %v352 = vmul.f32 %v318, 0.83775806
        %v353 = vand.u32 2147483647, %v352
        %vm354 = vcmp.le.f32.partialorder %v353, 0.7853982
        %vm355 = vcmp.lt.s32.totalorder %v352, 0
        %v356 = vand.u32 %v352, 2139095040
        %v357 = vshrl.u32 %v356, 23
        %v358 = vsub.s32 %v357, 127
        %v359 = vand.u32 2147483647, %v352
        %v360 = vand.u32 %v359, 8388607
        %v361 = vor.u32 %v360, 8388608
        %v362 = vsub.s32 0, %v361
        %v363 = vadd.s32 %v358, 1
        %vm364 = vcmp.gt.s32.totalorder %v363, 0
        %v365 = vsel %vm364, %v363, 0
        %v366 = vshrl.u32 %v365, 5
        %v367 = vand.u32 %v365, 31
        %v368 = vsub.s32 32, %v367
        %v369 = vshrl.u32 683565275, %v368
        %v370 = vshll.u32 683565275, %v367
        %v371 = vshrl.u32 2475754826, %v368
        %v372 = vor.u32 %v370, %v371
        %v373 = vshll.u32 2475754826, %v367
        %v374 = vshrl.u32 2131351028, %v368
        %v375 = vor.u32 %v373, %v374
        %v376 = vshll.u32 2131351028, %v367
        %v377 = vshrl.u32 2102212464, %v368
        %v378 = vor.u32 %v376, %v377
        %v379 = vshll.u32 2102212464, %v367
        %v380 = vshrl.u32 920167782, %v368
        %v381 = vor.u32 %v379, %v380
        %v382 = vshll.u32 920167782, %v367
        %v383 = vshrl.u32 1326507024, %v368
        %v384 = vor.u32 %v382, %v383
        %vm385 = vcmp.lt.s32.totalorder %v366, 1
        %vm386 = vcmp.lt.s32.totalorder %v366, 2
        %vm387 = vcmp.lt.s32.totalorder %v366, 3
        %vm388 = vcmp.lt.s32.totalorder %v366, 4
        %v389 = vsel %vm385, %v369, %v372
        %v390 = vsel %vm388, %v378, 2102212464
        %v391 = vsel %vm387, %v375, %v390
        %v392 = vsel %vm386, %v389, %v391
        %v393 = vsel %vm385, %v372, %v375
        %v394 = vsel %vm388, %v381, 920167782
        %v395 = vsel %vm387, %v378, %v394
        %v396 = vsel %vm386, %v393, %v395
        %v397 = vsel %vm385, %v375, %v378
        %v398 = vsel %vm388, %v384, 1326507024
        %v399 = vsel %vm387, %v381, %v398
        %v400 = vsel %vm386, %v397, %v399
        %v401 = vshll.u32 %v361, 8
        %v402 = vmul.u32.u64.compose %v401, %v400
        %v403 = vextract.low.u32 %v402
        %v404 = vextract.high.u32 %v402
        %v405 = vmul.u32.u64.compose %v401, %v396
        %v406 = vextract.low.u32 %v405
        %v407 = vextract.high.u32 %v405
        %v408 = vmul.u32 %v401, %v392
        %v409 = vadd.s32 %v404, %v406
        %vm410 = vc.u32 %v404, %v406
        %v411 = vadd.s32 %v407, 1
        %v412 = vsel %vm410, %v411, %v407
        %v413 = vadd.s32 %v408, %v412
        %v414 = vadd.s32 %v413, 536870912
        %v415 = vshrl.u32 %v414, 30
        %v416 = vshll.u32 %v415, 30
        %v417 = vsub.s32 %v413, %v416
        %vm418 = vcmp.lt.s32.totalorder %v417, 0
        %v419 = vsub.s32 0, %v417
        %v420 = vsel %vm418, %v419, %v417
        %v421 = vclz %v420
        %v422 = vsub.s32 %v421, 2
        %vm423 = vcmp.gt.s32.totalorder 0, %v422
        %v424 = vsel %vm423, 0, %v422
        %v425 = vsub.s32 32, %v424
        %v426 = vshll.u32 %v417, %v424
        %v427 = vshrl.u32 %v409, %v425
        %v428 = vor.u32 %v426, %v427
        %v429 = vsub.s32 4294967266, %v424
        %v430 = vadd.s32 %v429, 127
        %v431 = vshll.u32 %v430, 23
        %v432 = vor.u32 4788187, %v431
        %v433 = vand.u32 2147483647, %v432
        %v435 = vcvt.s32.f32 %v428
        %v436 = vmul.f32 %v435, %v433
        %v437 = vxor.u32 %v436, 2147483648
        %v438 = vsel %vm355, %v437, %v436
        %v439 = vsub.s32 4, %v415
        %v440 = vsel %vm355, %v439, %v415
        %v441 = vsel %vm354, %v352, %v438
        %v442 = vsel %vm354, 0, %v440
        %v443 = vcosq.f32.pop %v441
        %v444 = vsinq.f32.pop %v441
        %vm445 = vweird.f32 %v352
        %v446 = vand.u32 %v442, 3
        %vm447 = vcmp.lt.s32.totalorder %v446, 2
        %vm448 = vcmp.eq.s32.totalorder %v446, 0
        %v449 = vxor.u32 %v444, 2147483648
        %v450 = vsel %vm448, %v443, %v449
        %vm451 = vcmp.eq.s32.totalorder %v446, 2
        %v452 = vxor.u32 %v443, 2147483648
        %v453 = vsel %vm451, %v452, %v444
        %v454 = vsel %vm447, %v450, %v453
        %v455 = vsel %vm445, nan, %v454
        %v457 = vlaneseq
        %v458 = vshrl.u32 %v457, 7
        %v459 = vsub.s32 0, %v458
        %v460 = vrot.slane %v455, %v459
        %v461 = vlaneseq
        %v462 = vshrl.u32 %v461, 7
        %v463 = vsub.s32 1, %v462
        %v464 = vrot.slane %v455, %v463
        %v467 = vmul.f32 %v350, %v460
        %v468 = vmul.f32 %v351, %v464
        %v470 = vlaneseq
        %v471 = vshrl.u32 %v470, 7
        %v472 = vsub.s32 0, %v471
        %v473 = vrot.slane %v327, %v472
        %v474 = vlaneseq
        %v475 = vshrl.u32 %v474, 7
        %v476 = vsub.s32 2, %v475
        %v477 = vrot.slane %v327, %v476
        %v480 = vadd.f32 %v467, %v473
        %v481 = vadd.f32 %v468, %v477
        %v482 = vand.u32 2147483647, %v352
        %vm483 = vcmp.le.f32.partialorder %v482, 0.7853982
        %vm484 = vcmp.lt.s32.totalorder %v352, 0
        %v485 = vand.u32 %v352, 2139095040
        %v486 = vshrl.u32 %v485, 23
        %v487 = vsub.s32 %v486, 127
        %v488 = vand.u32 2147483647, %v352
        %v489 = vand.u32 %v488, 8388607
        %v490 = vor.u32 %v489, 8388608
        %v491 = vsub.s32 0, %v490
        %v492 = vadd.s32 %v487, 1
        %vm493 = vcmp.gt.s32.totalorder %v492, 0
        %v494 = vsel %vm493, %v492, 0
        %v495 = vshrl.u32 %v494, 5
        %v496 = vand.u32 %v494, 31
        %v497 = vsub.s32 32, %v496
        %v498 = vshrl.u32 683565275, %v497
        %v499 = vshll.u32 683565275, %v496
        %v500 = vshrl.u32 2475754826, %v497
        %v501 = vor.u32 %v499, %v500
        %v502 = vshll.u32 2475754826, %v496
        %v503 = vshrl.u32 2131351028, %v497
        %v504 = vor.u32 %v502, %v503
        %v505 = vshll.u32 2131351028, %v496
        %v506 = vshrl.u32 2102212464, %v497
        %v507 = vor.u32 %v505, %v506
        %v508 = vshll.u32 2102212464, %v496
        %v509 = vshrl.u32 920167782, %v497
        %v510 = vor.u32 %v508, %v509
        %v511 = vshll.u32 920167782, %v496
        %v512 = vshrl.u32 1326507024, %v497
        %v513 = vor.u32 %v511, %v512
        %vm514 = vcmp.lt.s32.totalorder %v495, 1
        %vm515 = vcmp.lt.s32.totalorder %v495, 2
        %vm516 = vcmp.lt.s32.totalorder %v495, 3
        %vm517 = vcmp.lt.s32.totalorder %v495, 4
        %v518 = vsel %vm514, %v498, %v501
        %v519 = vsel %vm517, %v507, 2102212464
        %v520 = vsel %vm516, %v504, %v519
        %v521 = vsel %vm515, %v518, %v520
        %v522 = vsel %vm514, %v501, %v504
        %v523 = vsel %vm517, %v510, 920167782
        %v524 = vsel %vm516, %v507, %v523
        %v525 = vsel %vm515, %v522, %v524
        %v526 = vsel %vm514, %v504, %v507
        %v527 = vsel %vm517, %v513, 1326507024
        %v528 = vsel %vm516, %v510, %v527
        %v529 = vsel %vm515, %v526, %v528
        %v530 = vshll.u32 %v490, 8
        %v531 = vmul.u32.u64.compose %v530, %v529
        %v532 = vextract.low.u32 %v531
        %v533 = vextract.high.u32 %v531
        %v534 = vmul.u32.u64.compose %v530, %v525
        %v535 = vextract.low.u32 %v534
        %v536 = vextract.high.u32 %v534
        %v537 = vmul.u32 %v530, %v521
        %v538 = vadd.s32 %v533, %v535
        %vm539 = vc.u32 %v533, %v535
        %v540 = vadd.s32 %v536, 1
        %v541 = vsel %vm539, %v540, %v536
        %v542 = vadd.s32 %v537, %v541
        %v543 = vadd.s32 %v542, 536870912
        %v544 = vshrl.u32 %v543, 30
        %v545 = vshll.u32 %v544, 30
        %v546 = vsub.s32 %v542, %v545
        %vm547 = vcmp.lt.s32.totalorder %v546, 0
        %v548 = vsub.s32 0, %v546
        %v549 = vsel %vm547, %v548, %v546
        %v550 = vclz %v549
        %v551 = vsub.s32 %v550, 2
        %vm552 = vcmp.gt.s32.totalorder 0, %v551
        %v553 = vsel %vm552, 0, %v551
        %v554 = vsub.s32 32, %v553
        %v555 = vshll.u32 %v546, %v553
        %v556 = vshrl.u32 %v538, %v554
        %v557 = vor.u32 %v555, %v556
        %v558 = vsub.s32 4294967266, %v553
        %v559 = vadd.s32 %v558, 127
        %v560 = vshll.u32 %v559, 23
        %v561 = vor.u32 4788187, %v560
        %v562 = vand.u32 2147483647, %v561
        %v564 = vcvt.s32.f32 %v557
        %v565 = vmul.f32 %v564, %v562
        %v566 = vxor.u32 %v565, 2147483648
        %v567 = vsel %vm484, %v566, %v565
        %v568 = vsub.s32 4, %v544
        %v569 = vsel %vm484, %v568, %v544
        %v570 = vsel %vm483, %v352, %v567
        %v571 = vsel %vm483, 0, %v569
        %v572 = vcosq.f32.pop %v570
        %v573 = vsinq.f32.pop %v570
        %vm574 = vweird.f32 %v352
        %v575 = vadd.s32 %v571, 3
        %v576 = vand.u32 %v575, 3
        %vm577 = vcmp.lt.s32.totalorder %v576, 2
        %vm578 = vcmp.eq.s32.totalorder %v576, 0
        %v579 = vxor.u32 %v573, 2147483648
        %v580 = vsel %vm578, %v572, %v579
        %vm581 = vcmp.eq.s32.totalorder %v576, 2
        %v582 = vxor.u32 %v572, 2147483648
        %v583 = vsel %vm581, %v582, %v573
        %v584 = vsel %vm577, %v580, %v583
        %v585 = vsel %vm574, nan, %v584
        %v587 = vlaneseq
        %v588 = vshrl.u32 %v587, 7
        %v589 = vsub.s32 0, %v588
        %v590 = vrot.slane %v585, %v589
        %v591 = vlaneseq
        %v592 = vshrl.u32 %v591, 7
        %v593 = vsub.s32 1, %v592
        %v594 = vrot.slane %v585, %v593
        %v597 = vmul.f32 %v350, %v590
        %v598 = vmul.f32 %v351, %v594
        %v599 = vlaneseq
        %v600 = vshrl.u32 %v599, 7
        %v601 = vsub.s32 1, %v600
        %v602 = vrot.slane %v327, %v601
        %v603 = vlaneseq
        %v604 = vshrl.u32 %v603, 7
        %v605 = vsub.s32 3, %v604
        %v606 = vrot.slane %v327, %v605
        %v609 = vadd.f32 %v597, %v602
        %v610 = vadd.f32 %v598, %v606
        %v613 = vrot.slane %v609, 7
        %v614 = vrot.slane %v610, 7
        %v617 = vsel %vm332, %v480, %v613
        %v618 = vsel %vm332, %v481, %v614
        %v621 = vcombine.low %v617, %v618
        %v623 = vunpack.c.l.s4 1983009808
        %v624 = vunpack.c.0.s8 %v623
        %v625 = vlaneseq
        %v626 = vshrl.u32 %v625, 7
        %v627 = vsub.s32 %v624, %v626
        %v628 = vrot.slane %v621, %v627
        %630 = vst [vmem:[%s281] sm:$0xf] %v628
        %s631 = sand.u32 %s150, 1
        %s632 = scalar_lea.sflag [#allocation3], %s631
        %s633 = sand.u32 %s150, 1
        %s634 = smul.addr %s633, 4
        %s635 = scalar_lea.vmem [#allocation2], %s634
        // Predicated region
        $region37: #{tpu_custom_call.1} parent=35 // pred_check
          %p636 = pneg %p160
        $region38: #{tpu_custom_call.1} parent=35 // pred_check_branch
          %638 = sbr.rel (%p636) target = $region40
        $region39: #{tpu_custom_call.1} parent=35 // pred_region
          %s639 = smul.u32 2, %s23
          %s641 = ssub.s32 64, 64
          %642 = vsyncadd %s632, %s641
          %s643 = smul.addr %s22, 2
          %s644 = sadd.s32 %s639, %s643
          %s645 = smul.addr %s644, 32
          %s646 = scalar_lea.hbm %s4, %s645
          %s648 = sshll.u32 %s635, 4
          %s649 = int_to_ptr.vmem [resolvable:$true] %s648
          %651 = dma.vmem_to_hbm [thread:$0]  %s649, 64, %s646, %s632
        $region40: #{tpu_custom_call.1} parent=35 // pred_fallthru
          _
      $region36: #{tpu_custom_call.1} parent=5 // pred_fallthru
        _
      %p652 = scmp.le.s32.totalorder 2, %s13
      // Predicated region
      $region41: #{tpu_custom_call.1} parent=5 // pred_check
        %p653 = pneg %p652
      $region42: #{tpu_custom_call.1} parent=5 // pred_check_branch
        %655 = sbr.rel (%p653) target = $region44
      $region43: #{tpu_custom_call.1} parent=5 // pred_region
        %s656 = ssub.s32 %s13, 2
        // Predicated region
        $region45: #{tpu_custom_call.1} parent=43 // pred_check
          %p657 = pneg %p166
        $region46: #{tpu_custom_call.1} parent=43 // pred_check_branch
          %659 = sbr.rel (%p657) target = $region48
        $region47: #{tpu_custom_call.1} parent=43 // pred_region
          %s660 = sand.u32 %s151, 1
          %s661 = scalar_lea.sflag [#allocation3], %s660
          %s662 = sand.u32 %s151, 1
          %s663 = smul.addr %s662, 4
          %s664 = scalar_lea.vmem [#allocation2], %s663
          %665 = dma.done %s661, 64
        $region48: #{tpu_custom_call.1} parent=43 // pred_fallthru
          _
      $region44: #{tpu_custom_call.1} parent=5 // pred_fallthru
        _
    $region6: #{tpu_custom_call.1} parent=1 // loop_footer
      %s17 = sadd.s32 1, %s13
    $region7: #{tpu_custom_call.1} parent=1 // loop_footer_branch
      %12 = sbr.rel target = $region3
    $region8: #{tpu_custom_call.1} parent=1 // loop_exit
      _
    %666 = vsyncpa [#allocation3], 1
    %s667 = scalar_lea.sflag [#allocation3], 1
    %668 = vsyncpa %s667, 1

</llo_original>
